<compile_context>
chip_gen: v7x
topology: tpu7x:2x2x1
jax: 0.10.0
libtpu: 0.0.40
codegen_flags: <defaults>
</compile_context>

<pallas_src>
import math

import jax
import jax.numpy as jnp
from jax.experimental import pallas as pl
from jax.experimental.pallas import tpu as pltpu


def attention_kernel(q_ref, k_ref, wq_ref, wk_ref, b_ref, o_ref):
    # q_ref/k_ref: (bm, p*H) packed row tiles (p original rows per packed row)
    # wq_ref/wk_ref: (p*H, p) block-diagonal folded score weights (grid-resident)
    # b_ref: (1,) scalar bias in SMEM
    # o_ref: (bm, p) sigmoid scores; o[m, j] is the score of original row m*p + j
    s = jnp.dot(q_ref[...], wq_ref[...], preferred_element_type=jnp.float32)
    s = s + jnp.dot(k_ref[...], wk_ref[...], preferred_element_type=jnp.float32)
    o_ref[...] = jax.nn.sigmoid(s + b_ref[0]).astype(o_ref.dtype)


def fold_attention_params(wq, wk, ws, b, pack):
    """Fold query/key/score projections into block-diagonal score weights.

    Exact algebraic fold (there is no nonlinearity between the Linears):
      sigmoid(cat(q@Wq^T, k@Wk^T) @ Ws^T + b) == sigmoid(q@vq + k@vk + b)
    with vq = Wq^T @ Ws[:, :H]^T, vk = Wk^T @ Ws[:, H:]^T.  The vectors are then
    expanded to block-diagonal (pack*H, pack) matrices so a packed row holding
    `pack` original rows produces `pack` independent scores in one matmul.
    Call once per (params, pack); not part of the per-call kernel path.
    """
    H = wq.shape[0]
    vq = wq.T @ ws[0, :H]                                   # (H,)
    vk = wk.T @ ws[0, H:]                                   # (H,)
    eye = jnp.eye(pack, dtype=jnp.float32)
    wq_mat = jnp.kron(eye, vq.reshape(H, 1)).astype(jnp.float32)   # (pack*H, pack)
    wk_mat = jnp.kron(eye, vk.reshape(H, 1)).astype(jnp.float32)   # (pack*H, pack)
    bias = jnp.asarray(b, jnp.float32).reshape(1)
    return wq_mat, wk_mat, bias


def attention_pallas(query, key, wq_mat, wk_mat, bias, *, target_rows=8192):
    """query, key: (N, H) float32.  wq_mat/wk_mat/bias from fold_attention_params.

    target_rows: original rows per grid step (~2 MiB of q+k input at H=32).
    """
    N, H = query.shape
    assert key.shape == (N, H)
    PH, p = wq_mat.shape
    assert PH == p * H and N % p == 0, "pack must divide N (use pack = gcd(N, 32))"
    M = N // p

    # Free row-major bitcast reshapes: no HBM data movement.
    q2 = query.reshape(M, PH)
    k2 = key.reshape(M, PH)

    # Row tile (in packed rows).  p < 4 blocks are lane-padded 4x/2x in VMEM, so
    # use a smaller byte budget there to stay inside v5e's 16 MiB scoped default.
    tgt = target_rows if p >= 4 else min(target_rows, 2048)
    bm = max(8, (tgt // p) // 8 * 8)
    if bm >= M:
        bm = M                       # single full-extent tile (always legal)
    n_tiles = -(-M // bm)            # partial last tile handled by Pallas masking

    out = pl.pallas_call(
        attention_kernel,
        out_shape=jax.ShapeDtypeStruct((M, p), query.dtype),
        grid_spec=pltpu.PrefetchScalarGridSpec(
            num_scalar_prefetch=0,
            grid=(n_tiles,),
            in_specs=[
                pl.BlockSpec((bm, PH), lambda i: (i, 0)),          # packed query rows
                pl.BlockSpec((bm, PH), lambda i: (i, 0)),          # packed key rows
                pl.BlockSpec((PH, p), lambda i: (0, 0)),           # folded q weights
                pl.BlockSpec((PH, p), lambda i: (0, 0)),           # folded k weights
                pl.BlockSpec(memory_space=pltpu.MemorySpace.SMEM),  # bias scalar
            ],
            out_specs=pl.BlockSpec((bm, p), lambda i: (i, 0)),
        ),
        compiler_params=pltpu.CompilerParams(
            dimension_semantics=("parallel",)),
    )(q2, k2, wq_mat, wk_mat, bias)

    return out.reshape(N, 1)         # free reshape back to per-original-row scores


def attention_ref(query, key, wq, wk, ws, b):
    # Pure-JAX reference mirroring the PyTorch forward exactly (unfused).
    qp = query @ wq.T
    kp = key @ wk.T
    cat = jnp.concatenate([qp, kp], axis=1)
    return jax.nn.sigmoid(cat @ ws.T + b)


if __name__ == "__main__":
    H = 32
    root = jax.random.PRNGKey(0)
    kwq, kwk, kws, kb = jax.random.split(root, 4)

    # Deterministic PyTorch-style parameter init.
    bound_h = 1.0 / jnp.sqrt(H)
    bound_2h = 1.0 / jnp.sqrt(2 * H)
    wq = jax.random.uniform(kwq, (H, H), jnp.float32, -bound_h, bound_h)        # query_proj.weight
    wk = jax.random.uniform(kwk, (H, H), jnp.float32, -bound_h, bound_h)        # key_proj.weight
    ws = jax.random.uniform(kws, (1, 2 * H), jnp.float32, -bound_2h, bound_2h)  # score_proj.weight
    b = jax.random.uniform(kb, (1,), jnp.float32, -bound_2h, bound_2h)          # score_proj.bias

    run = jax.jit(attention_pallas, static_argnames=("target_rows",))

    # N=8: tiny batch (pack=8, single tile); N=300: pack=4, single full tile;
    # N=1000 with a small target_rows: multi-tile parallel grid + partial last block.
    for N, tgt in ((8, 8192), (300, 8192), (1000, 256)):
        pack = math.gcd(N, 32)
        wq_mat, wk_mat, bias = fold_attention_params(wq, wk, ws, b, pack)

        kq_i, kk_i = jax.random.split(jax.random.fold_in(root, N))
        query = jax.random.normal(kq_i, (N, H), jnp.float32)
        key = jax.random.normal(kk_i, (N, H), jnp.float32)

        out = jax.block_until_ready(
            run(query, key, wq_mat, wk_mat, bias, target_rows=tgt))
        ref = attention_ref(query, key, wq, wk, ws, b)

        assert out.shape == (N, 1)
        assert jnp.allclose(out, ref, atol=2e-5, rtol=1e-4), (
            N, float(jnp.max(jnp.abs(out - ref))))

    print("KERNEL_OK")
</pallas_src>

<mosaic_0001>
module attributes {stable_mosaic.version = 11 : i64} {
  func.func @attention_kernel(%arg0: i32, %arg1: memref<1x256xf32, #tpu.memory_space<vmem>>, %arg2: memref<1x256xf32, #tpu.memory_space<vmem>>, %arg3: memref<256x8xf32, #tpu.memory_space<vmem>>, %arg4: memref<256x8xf32, #tpu.memory_space<vmem>>, %arg5: memref<1xf32, #tpu.memory_space<smem>>, %arg6: memref<1x8xf32, #tpu.memory_space<vmem>>) attributes {dimension_semantics = [#tpu.dimension_semantics<parallel>], iteration_bounds = array<i64: 1>, scalar_prefetch = 0 : i64, scratch_operands = 0 : i64, tpu.core_type = #tpu.core_type<tc>, window_params = [{transform_indices = @transform_0, window_bounds = array<i64: 1, 256>}, {transform_indices = @transform_1, window_bounds = array<i64: 1, 256>}, {pipeline_mode = #tpu.pipeline_mode<synchronous>, transform_indices = @transform_2, window_bounds = array<i64: 256, 8>}, {pipeline_mode = #tpu.pipeline_mode<synchronous>, transform_indices = @transform_3, window_bounds = array<i64: 256, 8>}, {transform_indices = @transform_4, window_bounds = array<i64: 1>}, {transform_indices = @transform_5, window_bounds = array<i64: 1, 8>}]} {
    %c0 = arith.constant 0 : index
    %c0_0 = arith.constant 0 : index
    %0 = vector.load %arg1[%c0, %c0_0] : memref<1x256xf32, #tpu.memory_space<vmem>>, vector<1x256xf32>
    %c0_1 = arith.constant 0 : index
    %c0_2 = arith.constant 0 : index
    %1 = vector.load %arg3[%c0_1, %c0_2] : memref<256x8xf32, #tpu.memory_space<vmem>>, vector<256x8xf32>
    %cst = arith.constant dense<0.000000e+00> : vector<1x8xf32>
    %2 = tpu.matmul %0, %1, %cst {dimension_numbers = #tpu.dot_dimension_numbers<[1], [0], [0], [1], [0, 0, 1, 1], [], []>} : vector<1x256xf32>, vector<256x8xf32>, vector<1x8xf32> -> vector<1x8xf32>
    %c0_3 = arith.constant 0 : index
    %c0_4 = arith.constant 0 : index
    %3 = vector.load %arg2[%c0_3, %c0_4] : memref<1x256xf32, #tpu.memory_space<vmem>>, vector<1x256xf32>
    %c0_5 = arith.constant 0 : index
    %c0_6 = arith.constant 0 : index
    %4 = vector.load %arg4[%c0_5, %c0_6] : memref<256x8xf32, #tpu.memory_space<vmem>>, vector<256x8xf32>
    %cst_7 = arith.constant dense<0.000000e+00> : vector<1x8xf32>
    %5 = tpu.matmul %3, %4, %cst_7 {dimension_numbers = #tpu.dot_dimension_numbers<[1], [0], [0], [1], [0, 0, 1, 1], [], []>} : vector<1x256xf32>, vector<256x8xf32>, vector<1x8xf32> -> vector<1x8xf32>
    %6 = arith.addf %2, %5 : vector<1x8xf32>
    %c0_8 = arith.constant 0 : index
    %7 = memref.load %arg5[%c0_8] : memref<1xf32, #tpu.memory_space<smem>>
    %8 = vector.broadcast %7 : f32 to vector<1x8xf32>
    %9 = arith.addf %6, %8 : vector<1x8xf32>
    %10 = arith.negf %9 : vector<1x8xf32>
    %11 = math.exp %10 : vector<1x8xf32>
    %cst_9 = arith.constant 1.000000e+00 : f32
    %12 = vector.broadcast %cst_9 : f32 to vector<1x8xf32>
    %13 = arith.addf %12, %11 : vector<1x8xf32>
    %14 = arith.divf %12, %13 : vector<1x8xf32>
    %c0_10 = arith.constant 0 : index
    %c0_11 = arith.constant 0 : index
    %15 = vector.load %arg6[%c0_10, %c0_11] : memref<1x8xf32, #tpu.memory_space<vmem>>, vector<1x8xf32>
    tpu.vector_store %arg6[%c0_10, %c0_11], %14 {strides = array<i32>} : memref<1x8xf32, #tpu.memory_space<vmem>>, vector<1x8xf32>,
    return
  }
  func.func @transform_0(%arg0: i32) -> (i32, i32) {
    %c0_i32 = arith.constant 0 : i32
    %c0_i32_0 = arith.constant 0 : i32
    return %arg0, %c0_i32 : i32, i32
  }
  func.func @transform_1(%arg0: i32) -> (i32, i32) {
    %c0_i32 = arith.constant 0 : i32
    %c0_i32_0 = arith.constant 0 : i32
    return %arg0, %c0_i32 : i32, i32
  }
  func.func @transform_2(%arg0: i32) -> (i32, i32) {
    %c0_i32 = arith.constant 0 : i32
    %c0_i32_0 = arith.constant 0 : i32
    %c0_i32_1 = arith.constant 0 : i32
    return %c0_i32, %c0_i32_0 : i32, i32
  }
  func.func @transform_3(%arg0: i32) -> (i32, i32) {
    %c0_i32 = arith.constant 0 : i32
    %c0_i32_0 = arith.constant 0 : i32
    %c0_i32_1 = arith.constant 0 : i32
    return %c0_i32, %c0_i32_0 : i32, i32
  }
  func.func @transform_4(%arg0: i32) -> i32 {
    %c0_i32 = arith.constant 0 : i32
    %c0_i32_0 = arith.constant 0 : i32
    return %c0_i32 : i32
  }
  func.func @transform_5(%arg0: i32) -> (i32, i32) {
    %c0_i32 = arith.constant 0 : i32
    %c0_i32_0 = arith.constant 0 : i32
    return %arg0, %c0_i32 : i32, i32
  }
}

</mosaic_0001>

<llo_original>
// kernel: attention_pallas.1
$region0: #{attention_pallas.1}
  #allocation0 [shape = 'u32[]', space=smem, size = 0x4, offset = 0x4, fixed_abs, tag = 'smem constant byte address 0x4 - core index']
  #allocation1 [shape = 'u32[144,128]{1,0:T(1,128)}', space=vmem, size = 0x12000, scoped, tag = 'internal scratch']
  #allocation2 [shape = 'f32[1]{0:T(128)S(6)}', space=smem, size = 0x200, scoped, tag = 'scoped memory for attention_pallas.1']
  %s0 = inlined_call_operand.vmem [shape: f32[1,256], index: 0, kind: input, shape index: {}]
  %s1 = inlined_call_operand.vmem [shape: f32[1,256], index: 1, kind: input, shape index: {}]
  %s2 = inlined_call_operand.vmem [shape: f32[256,8], index: 2, kind: input, shape index: {}]
  %s3 = inlined_call_operand.vmem [shape: f32[256,8], index: 3, kind: input, shape index: {}]
  %s4 = inlined_call_operand.<no memory space> [shape: f32[1], index: 4, kind: input, shape index: {}]
  %s5 = inlined_call_operand.hbm [shape: f32[1,8], index: 5, kind: output, shape index: {}]
  %s6 = sld [smem:[#allocation0]]
  $region30: #{attention_pallas.1} parent=0
    _
  %s8 = ssub.s32 1, %s6
  %s9 = scalar_select 0, %s8, %s6
  %10 = sst [smem:[#allocation2]] %s4
  $region1: #{attention_pallas.1} parent=0
    #allocation3 [shape = 'u8[512]{0}', space=vmem, size = 0x400, scoped, tag = 'output window, operand 0, single buffered']
    #allocation4 [shape = 's32[1]{0}', space=sflag, size = 0x4, scoped, tag = 'scoped memory for attention_pallas.1']
    %11 = vsyncpa [#allocation4], 0
    // Predicated region
    $region2: #{attention_pallas.1} parent=1 // pred_check
      _
    $region3: #{attention_pallas.1} parent=1 // pred_check_branch
      %13 = sbr.rel (0) target = $region5
    $region4: #{attention_pallas.1} parent=1 // pred_region
      _
    $region5: #{attention_pallas.1} parent=1 // pred_fallthru
      _
    // Predicated region
    $region6: #{attention_pallas.1} parent=1 // pred_check
      _
    $region7: #{attention_pallas.1} parent=1 // pred_check_branch
      %15 = sbr.rel (0) target = $region9
    $region8: #{attention_pallas.1} parent=1 // pred_region
      _
    $region9: #{attention_pallas.1} parent=1 // pred_fallthru
      _
    // Predicated region
    $region10: #{attention_pallas.1} parent=1 // pred_check
      _
    $region11: #{attention_pallas.1} parent=1 // pred_check_branch
      %17 = sbr.rel (0) target = $region13
    $region12: #{attention_pallas.1} parent=1 // pred_region
      _
    $region13: #{attention_pallas.1} parent=1 // pred_fallthru
      _
    // Predicated region
    $region14: #{attention_pallas.1} parent=1 // pred_check
      _
    $region15: #{attention_pallas.1} parent=1 // pred_check_branch
      %19 = sbr.rel (0) target = $region17
    $region16: #{attention_pallas.1} parent=1 // pred_region
      _
    $region17: #{attention_pallas.1} parent=1 // pred_fallthru
      _
    // Predicated region
    $region18: #{attention_pallas.1} parent=1 // pred_check
      _
    $region19: #{attention_pallas.1} parent=1 // pred_check_branch
      %21 = sbr.rel (0) target = $region21
    $region20: #{attention_pallas.1} parent=1 // pred_region
      _
    $region21: #{attention_pallas.1} parent=1 // pred_fallthru
      _
    %v22 = vld [vmem:[%s0] sm:$0x3]
    %v23 = vld [vmem:[%s2] sm:$0xff]
    %v24 = vld [vmem:[%s2 + $0x8] sm:$0xff]
    %v25 = vld [vmem:[%s2 + $0x10] sm:$0xff]
    %v26 = vld [vmem:[%s2 + $0x18] sm:$0xff]
    %v27 = vld [vmem:[%s2 + $0x20] sm:$0xff]
    %v28 = vld [vmem:[%s2 + $0x28] sm:$0xff]
    %v29 = vld [vmem:[%s2 + $0x30] sm:$0xff]
    %v30 = vld [vmem:[%s2 + $0x38] sm:$0xff]
    %v31 = vld [vmem:[%s2 + $0x40] sm:$0xff]
    %v32 = vld [vmem:[%s2 + $0x48] sm:$0xff]
    %v33 = vld [vmem:[%s2 + $0x50] sm:$0xff]
    %v34 = vld [vmem:[%s2 + $0x58] sm:$0xff]
    %v35 = vld [vmem:[%s2 + $0x60] sm:$0xff]
    %v36 = vld [vmem:[%s2 + $0x68] sm:$0xff]
    %v37 = vld [vmem:[%s2 + $0x70] sm:$0xff]
    %v38 = vld [vmem:[%s2 + $0x78] sm:$0xff]
    %v39 = vld [vmem:[%s2 + $0x80] sm:$0xff]
    %v40 = vld [vmem:[%s2 + $0x88] sm:$0xff]
    %v41 = vld [vmem:[%s2 + $0x90] sm:$0xff]
    %v42 = vld [vmem:[%s2 + $0x98] sm:$0xff]
    %v43 = vld [vmem:[%s2 + $0xa0] sm:$0xff]
    %v44 = vld [vmem:[%s2 + $0xa8] sm:$0xff]
    %v45 = vld [vmem:[%s2 + $0xb0] sm:$0xff]
    %v46 = vld [vmem:[%s2 + $0xb8] sm:$0xff]
    %v47 = vld [vmem:[%s2 + $0xc0] sm:$0xff]
    %v48 = vld [vmem:[%s2 + $0xc8] sm:$0xff]
    %v49 = vld [vmem:[%s2 + $0xd0] sm:$0xff]
    %v50 = vld [vmem:[%s2 + $0xd8] sm:$0xff]
    %v51 = vld [vmem:[%s2 + $0xe0] sm:$0xff]
    %v52 = vld [vmem:[%s2 + $0xe8] sm:$0xff]
    %v53 = vld [vmem:[%s2 + $0xf0] sm:$0xff]
    %v54 = vld [vmem:[%s2 + $0xf8] sm:$0xff]
    %v55 = vld [vmem:[%s1] sm:$0x3]
    %v56 = vld [vmem:[%s3] sm:$0xff]
    %v57 = vld [vmem:[%s3 + $0x8] sm:$0xff]
    %v58 = vld [vmem:[%s3 + $0x10] sm:$0xff]
    %v59 = vld [vmem:[%s3 + $0x18] sm:$0xff]
    %v60 = vld [vmem:[%s3 + $0x20] sm:$0xff]
    %v61 = vld [vmem:[%s3 + $0x28] sm:$0xff]
    %v62 = vld [vmem:[%s3 + $0x30] sm:$0xff]
    %v63 = vld [vmem:[%s3 + $0x38] sm:$0xff]
    %v64 = vld [vmem:[%s3 + $0x40] sm:$0xff]
    %v65 = vld [vmem:[%s3 + $0x48] sm:$0xff]
    %v66 = vld [vmem:[%s3 + $0x50] sm:$0xff]
    %v67 = vld [vmem:[%s3 + $0x58] sm:$0xff]
    %v68 = vld [vmem:[%s3 + $0x60] sm:$0xff]
    %v69 = vld [vmem:[%s3 + $0x68] sm:$0xff]
    %v70 = vld [vmem:[%s3 + $0x70] sm:$0xff]
    %v71 = vld [vmem:[%s3 + $0x78] sm:$0xff]
    %v72 = vld [vmem:[%s3 + $0x80] sm:$0xff]
    %v73 = vld [vmem:[%s3 + $0x88] sm:$0xff]
    %v74 = vld [vmem:[%s3 + $0x90] sm:$0xff]
    %v75 = vld [vmem:[%s3 + $0x98] sm:$0xff]
    %v76 = vld [vmem:[%s3 + $0xa0] sm:$0xff]
    %v77 = vld [vmem:[%s3 + $0xa8] sm:$0xff]
    %v78 = vld [vmem:[%s3 + $0xb0] sm:$0xff]
    %v79 = vld [vmem:[%s3 + $0xb8] sm:$0xff]
    %v80 = vld [vmem:[%s3 + $0xc0] sm:$0xff]
    %v81 = vld [vmem:[%s3 + $0xc8] sm:$0xff]
    %v82 = vld [vmem:[%s3 + $0xd0] sm:$0xff]
    %v83 = vld [vmem:[%s3 + $0xd8] sm:$0xff]
    %v84 = vld [vmem:[%s3 + $0xe0] sm:$0xff]
    %v85 = vld [vmem:[%s3 + $0xe8] sm:$0xff]
    %v86 = vld [vmem:[%s3 + $0xf0] sm:$0xff]
    %v87 = vld [vmem:[%s3 + $0xf8] sm:$0xff]
    %v89 = vlaneseq
    %v90 = vshrl.u32 %v89, 7
    %v91 = vsub.s32 0, %v90
    %v92 = vrot.slane %v55, %v91
    %v93 = vlaneseq
    %v94 = vshrl.u32 %v93, 7
    %v95 = vsub.s32 1, %v94
    %v96 = vrot.slane %v55, %v95
    %99 = vmatprep.subr.mxu0 0.0
    %100 = vmatpush1.msra.mxu0 %v56
    %101 = vmatprep.subr.mxu0 0.0
    %102 = vmatpush1.msra.mxu0 %v57
    %103 = vmatprep.subr.mxu0 0.0
    %104 = vmatpush1.msra.mxu0 %v58
    %105 = vmatprep.subr.mxu0 0.0
    %106 = vmatpush1.msra.mxu0 %v59
    %107 = vmatprep.subr.mxu0 0.0
    %108 = vmatpush1.msra.mxu0 %v60
    %109 = vmatprep.subr.mxu0 0.0
    %110 = vmatpush1.msra.mxu0 %v61
    %111 = vmatprep.subr.mxu0 0.0
    %112 = vmatpush1.msra.mxu0 %v62
    %113 = vmatprep.subr.mxu0 0.0
    %114 = vmatpush1.msra.mxu0 %v63
    %115 = vmatprep.subr.mxu0 0.0
    %116 = vmatpush1.msra.mxu0 %v64
    %117 = vmatprep.subr.mxu0 0.0
    %118 = vmatpush1.msra.mxu0 %v65
    %119 = vmatprep.subr.mxu0 0.0
    %120 = vmatpush1.msra.mxu0 %v66
    %121 = vmatprep.subr.mxu0 0.0
    %122 = vmatpush1.msra.mxu0 %v67
    %123 = vmatprep.subr.mxu0 0.0
    %124 = vmatpush1.msra.mxu0 %v68
    %125 = vmatprep.subr.mxu0 0.0
    %126 = vmatpush1.msra.mxu0 %v69
    %127 = vmatprep.subr.mxu0 0.0
    %128 = vmatpush1.msra.mxu0 %v70
    %129 = vmatprep.subr.mxu0 0.0
    %130 = vmatpush1.msra.mxu0 %v71
    %131 = vmatprep.subr.mxu0 0.0
    %132 = vmatpush1.msra.mxu0 %v72
    %133 = vmatprep.subr.mxu0 0.0
    %134 = vmatpush1.msra.mxu0 %v73
    %135 = vmatprep.subr.mxu0 0.0
    %136 = vmatpush1.msra.mxu0 %v74
    %137 = vmatprep.subr.mxu0 0.0
    %138 = vmatpush1.msra.mxu0 %v75
    %139 = vmatprep.subr.mxu0 0.0
    %140 = vmatpush1.msra.mxu0 %v76
    %141 = vmatprep.subr.mxu0 0.0
    %142 = vmatpush1.msra.mxu0 %v77
    %143 = vmatprep.subr.mxu0 0.0
    %144 = vmatpush1.msra.mxu0 %v78
    %145 = vmatprep.subr.mxu0 0.0
    %146 = vmatpush1.msra.mxu0 %v79
    %147 = vmatprep.subr.mxu0 0.0
    %148 = vmatpush1.msra.mxu0 %v80
    %149 = vmatprep.subr.mxu0 0.0
    %150 = vmatpush1.msra.mxu0 %v81
    %151 = vmatprep.subr.mxu0 0.0
    %152 = vmatpush1.msra.mxu0 %v82
    %153 = vmatprep.subr.mxu0 0.0
    %154 = vmatpush1.msra.mxu0 %v83
    %155 = vmatprep.subr.mxu0 0.0
    %156 = vmatpush1.msra.mxu0 %v84
    %157 = vmatprep.subr.mxu0 0.0
    %158 = vmatpush1.msra.mxu0 %v85
    %159 = vmatprep.subr.mxu0 0.0
    %160 = vmatpush1.msra.mxu0 %v86
    %161 = vmatprep.subr.mxu0 0.0
    %162 = vmatpush1.msra.mxu0 %v87
    %163 = vmatprep.mubr.f32.mxu0 %v96
    %164 = vmatmul.mubr.f32.gmra.mrb[0].mxu0 %v92
    %v165 = vpop.f32.mrb[0].mxu0
    %v166 = vadd.f32 0.0, %v165
    %v167 = vpop.f32.mrb[0].mxu0
    %168 = vdwg.mxu0
    %v170 = vlaneseq
    %v171 = vshrl.u32 %v170, 7
    %v172 = vsub.s32 0, %v171
    %v173 = vrot.slane %v22, %v172
    %v174 = vlaneseq
    %v175 = vshrl.u32 %v174, 7
    %v176 = vsub.s32 1, %v175
    %v177 = vrot.slane %v22, %v176
    %180 = vmatprep.subr.mxu0 0.0
    %181 = vmatpush1.msra.mxu0 %v23
    %182 = vmatprep.subr.mxu0 0.0
    %183 = vmatpush1.msra.mxu0 %v24
    %184 = vmatprep.subr.mxu0 0.0
    %185 = vmatpush1.msra.mxu0 %v25
    %186 = vmatprep.subr.mxu0 0.0
    %187 = vmatpush1.msra.mxu0 %v26
    %188 = vmatprep.subr.mxu0 0.0
    %189 = vmatpush1.msra.mxu0 %v27
    %190 = vmatprep.subr.mxu0 0.0
    %191 = vmatpush1.msra.mxu0 %v28
    %192 = vmatprep.subr.mxu0 0.0
    %193 = vmatpush1.msra.mxu0 %v29
    %194 = vmatprep.subr.mxu0 0.0
    %195 = vmatpush1.msra.mxu0 %v30
    %196 = vmatprep.subr.mxu0 0.0
    %197 = vmatpush1.msra.mxu0 %v31
    %198 = vmatprep.subr.mxu0 0.0
    %199 = vmatpush1.msra.mxu0 %v32
    %200 = vmatprep.subr.mxu0 0.0
    %201 = vmatpush1.msra.mxu0 %v33
    %202 = vmatprep.subr.mxu0 0.0
    %203 = vmatpush1.msra.mxu0 %v34
    %204 = vmatprep.subr.mxu0 0.0
    %205 = vmatpush1.msra.mxu0 %v35
    %206 = vmatprep.subr.mxu0 0.0
    %207 = vmatpush1.msra.mxu0 %v36
    %208 = vmatprep.subr.mxu0 0.0
    %209 = vmatpush1.msra.mxu0 %v37
    %210 = vmatprep.subr.mxu0 0.0
    %211 = vmatpush1.msra.mxu0 %v38
    %212 = vmatprep.subr.mxu0 0.0
    %213 = vmatpush1.msra.mxu0 %v39
    %214 = vmatprep.subr.mxu0 0.0
    %215 = vmatpush1.msra.mxu0 %v40
    %216 = vmatprep.subr.mxu0 0.0
    %217 = vmatpush1.msra.mxu0 %v41
    %218 = vmatprep.subr.mxu0 0.0
    %219 = vmatpush1.msra.mxu0 %v42
    %220 = vmatprep.subr.mxu0 0.0
    %221 = vmatpush1.msra.mxu0 %v43
    %222 = vmatprep.subr.mxu0 0.0
    %223 = vmatpush1.msra.mxu0 %v44
    %224 = vmatprep.subr.mxu0 0.0
    %225 = vmatpush1.msra.mxu0 %v45
    %226 = vmatprep.subr.mxu0 0.0
    %227 = vmatpush1.msra.mxu0 %v46
    %228 = vmatprep.subr.mxu0 0.0
    %229 = vmatpush1.msra.mxu0 %v47
    %230 = vmatprep.subr.mxu0 0.0
    %231 = vmatpush1.msra.mxu0 %v48
    %232 = vmatprep.subr.mxu0 0.0
    %233 = vmatpush1.msra.mxu0 %v49
    %234 = vmatprep.subr.mxu0 0.0
    %235 = vmatpush1.msra.mxu0 %v50
    %236 = vmatprep.subr.mxu0 0.0
    %237 = vmatpush1.msra.mxu0 %v51
    %238 = vmatprep.subr.mxu0 0.0
    %239 = vmatpush1.msra.mxu0 %v52
    %240 = vmatprep.subr.mxu0 0.0
    %241 = vmatpush1.msra.mxu0 %v53
    %242 = vmatprep.subr.mxu0 0.0
    %243 = vmatpush1.msra.mxu0 %v54
    %244 = vmatprep.mubr.f32.mxu0 %v177
    %245 = vmatmul.mubr.f32.gmra.mrb[0].mxu0 %v173
    %v246 = vpop.f32.mrb[0].mxu0
    %v247 = vadd.f32 %v166, %v246
    %v248 = vpop.f32.mrb[0].mxu0
    %249 = vdwg.mxu0
    %s250 = sld [smem:[#allocation2]]
    %v251 = vstv %s250
    %v252 = vadd.f32 %v247, %v251
    %v253 = vxor.u32 %v252, 2147483648
    %v254 = vmul.f32 %v253, 1.442695
    %v255 = vpow.pop %v254
    %v256 = vadd.f32 %v255, 1.0
    %v257 = vrcp.pop %v256
    %v258 = vmul.f32 1.0, %v257
    %vm259 = vcmask 57344
    %260 = vst.msk [vmem:[#allocation3] sm:$0x1] %vm259, %v258
    // Predicated region
    $region22: #{attention_pallas.1} parent=1 // pred_check
      _
    $region23: #{attention_pallas.1} parent=1 // pred_check_branch
      %262 = sbr.rel (0) target = $region25
    $region24: #{attention_pallas.1} parent=1 // pred_region
      %s264 = ssub.s32 16, 16
      %265 = vsyncadd [#allocation4], %s264
      %s267 = sshll.u32 [#allocation3], 4
      %s268 = int_to_ptr.vmem [resolvable:$true] %s267
      %270 = dma.vmem_to_hbm [thread:$0]  %s268, 16, %s5, [#allocation4]
    $region25: #{attention_pallas.1} parent=1 // pred_fallthru
      _
    // Predicated region
    $region26: #{attention_pallas.1} parent=1 // pred_check
      _
    $region27: #{attention_pallas.1} parent=1 // pred_check_branch
      %272 = sbr.rel (0) target = $region29
    $region28: #{attention_pallas.1} parent=1 // pred_region
      %273 = dma.done [#allocation4], 16
    $region29: #{attention_pallas.1} parent=1 // pred_fallthru
      _
    %274 = vsyncpa [#allocation4], 1

</llo_original>
